<compile_context>
chip_gen: v6e
topology: v6e:2x2x1
jax: 0.10.0
libtpu: 0.0.40
codegen_flags: <defaults>
</compile_context>

<pallas_src>
import jax
import jax.numpy as jnp
from jax.experimental import pallas as pl
from jax.experimental.pallas import tpu as pltpu

EPS = 1e-6


def _round_up(x, m):
    return ((x + m - 1) // m) * m


def _make_kernel(d, tn, dot_precision):
    """d: true feature width; tn: output-column stripe width (tn divides d)."""

    def kernel(x_ref, gamma_ref, beta_ref, w_ref, b_ref, o_ref):
        x = x_ref[...].astype(jnp.float32)            # (TM, D)
        gamma = gamma_ref[...].astype(jnp.float32)    # (1, D)
        beta = beta_ref[...].astype(jnp.float32)      # (1, D)
        bias = b_ref[...].astype(jnp.float32)         # (1, TN)

        # --- LayerNorm (torch-style unbiased std; eps added to the std) ---
        mean = jnp.sum(x, axis=-1, keepdims=True) * (1.0 / d)
        centered = x - mean
        var_unbiased = jnp.sum(centered * centered, axis=-1, keepdims=True) * (
            1.0 / (d - 1))
        # One reciprocal per row on the EUP; normalisation stays pure VPU muls.
        inv = pl.reciprocal(jnp.sqrt(var_unbiased) + EPS, approx=False)  # (TM,1)
        normed = centered * inv * gamma + beta                           # (TM,D)

        # --- sublayer: Linear(D, D) column stripe, f32 accumulation on MXU ---
        y = jnp.dot(normed.astype(w_ref.dtype), w_ref[...],
                    preferred_element_type=jnp.float32,
                    precision=dot_precision) + bias                      # (TM,TN)

        # --- dropout (eval mode == identity) + residual ---
        # TODO(synk): training-mode dropout (random mask) not implemented.
        if tn == d:
            x_res = x                                    # single stripe: reuse
        else:
            off = pl.multiple_of(pl.program_id(1) * tn, 128)
            x_res = x_ref[:, pl.ds(off, tn)].astype(jnp.float32)
        o_ref[...] = (x_res + y).astype(o_ref.dtype)

    return kernel


def sublayer_connection(x, gamma, beta, w, b, *, block_rows=512, mxu_dtype=None):
    """x: [B, S, D]; gamma/beta/b: [D]; w: [D, D] (applied as normed @ w + b)."""
    B, S, D = x.shape
    assert D >= 2, "LayerNorm with unbiased std requires at least 2 features"
    R = B * S
    itemsize = jnp.dtype(x.dtype).itemsize

    # Deliberate MXU operand-dtype / precision choice (see header note).
    if mxu_dtype is None:
        mxu_dtype = jnp.bfloat16 if x.dtype == jnp.bfloat16 else jnp.float32
    mxu_dtype = jnp.dtype(mxu_dtype)
    dot_precision = (jax.lax.Precision.HIGHEST if mxu_dtype == jnp.float32
                     else jax.lax.Precision.DEFAULT)
    w_itemsize = mxu_dtype.itemsize

    # --- generation-aware VMEM ceiling --------------------------------------
    try:
        vmem_cap = int(pltpu.get_tpu_info().vmem_capacity_bytes)
    except Exception:
        vmem_cap = 64 << 20      # conservative (v7x) if the query is unavailable
    # ~52 MiB usable per core on v7x, ~100 MiB on v5e/v6e.
    ceiling = min(vmem_cap - (12 << 20), 100 << 20)

    # --- tile sizing ----------------------------------------------------------
    def vmem_estimate(tm, tn):
        return (2 * tm * D * itemsize          # x blocks (double-buffered)
                + 2 * tm * tn * itemsize       # out blocks (double-buffered)
                + 2 * D * tn * w_itemsize      # weight stripe / resident weight
                + 6 * D * 4                    # gamma / beta / bias
                + 5 * tm * D * 4               # in-kernel f32 temporaries
                + 2 * tm * tn * 4)             # f32 matmul result + residual

    TM = min(block_rows, _round_up(R, 8))
    TN = D
    # If the resident weight + tiles exceed the budget (large D on v7x), stream
    # the weight in column stripes first (keeps the big row tile for HBM BW),
    # then shrink the row tile as a last resort.
    while (vmem_estimate(TM, TN) > ceiling and TN % 2 == 0
           and TN // 2 >= 128 and D % (TN // 2) == 0):
        TN //= 2
    while vmem_estimate(TM, TN) > ceiling and TM >= 128:
        TM //= 2
    # TODO(synk): a K-tiled accumulator variant would be needed for pathological
    # D (not reducible by halving) whose footprint still exceeds the ceiling.

    n_i = pl.cdiv(R, TM)       # partial last row block: OOB writes are dropped
    n_j = D // TN

    x2 = x.reshape(R, D)       # leading-dim merge: no HBM copy
    gamma2 = gamma.reshape(1, D)
    beta2 = beta.reshape(1, D)
    b2 = b.reshape(1, D)
    w2 = w.astype(mxu_dtype)

    vmem_limit = int(min(ceiling, max(int(1.5 * vmem_estimate(TM, TN)),
                                      32 << 20)))

    out = pl.pallas_call(
        _make_kernel(D, TN, dot_precision),
        out_shape=jax.ShapeDtypeStruct((R, D), x.dtype),
        grid=(n_i, n_j),
        in_specs=[
            pl.BlockSpec((TM, D), lambda i, j: (i, 0)),   # x: row-tiled, reused over j
            pl.BlockSpec((1, D), lambda i, j: (0, 0)),    # gamma: VMEM-resident
            pl.BlockSpec((1, D), lambda i, j: (0, 0)),    # beta:  VMEM-resident
            pl.BlockSpec((D, TN), lambda i, j: (0, j)),   # w: resident (n_j==1) or streamed stripe
            pl.BlockSpec((1, TN), lambda i, j: (0, j)),   # bias stripe
        ],
        out_specs=pl.BlockSpec((TM, TN), lambda i, j: (i, j)),
        # Alias x -> out.  Copy-free only when the caller donates x (see
        # __main__); without donation XLA inserts a protective copy.
        input_output_aliases={0: 0},
        compiler_params=pltpu.CompilerParams(
            dimension_semantics=("parallel", "parallel"),
            vmem_limit_bytes=vmem_limit),
    )(x2, gamma2, beta2, w2, b2)

    return out.reshape(B, S, D)


def reference(x, gamma, beta, w, b):
    d = x.shape[-1]
    mean = jnp.mean(x, axis=-1, keepdims=True)
    centered = x - mean
    std = jnp.sqrt(jnp.sum(centered * centered, axis=-1, keepdims=True) / (d - 1))
    normed = gamma * centered / (std + EPS) + beta
    y = normed @ w + b
    return x + y


if __name__ == "__main__":
    B, S, D = 2, 8, 32
    key = jax.random.PRNGKey(0)
    kx, kw, kb = jax.random.split(key, 3)

    x = jax.random.normal(kx, (B, S, D), dtype=jnp.float32)
    # LayerNorm params (torch init: ones / zeros)
    gamma = jnp.ones((D,), dtype=jnp.float32)
    beta = jnp.zeros((D,), dtype=jnp.float32)
    # Deterministic sublayer (Linear D->D) params
    w = jax.random.normal(kw, (D, D), dtype=jnp.float32) * 0.05
    b = jax.random.normal(kb, (D,), dtype=jnp.float32) * 0.01

    # Reference first: x is donated to the jitted kernel call below.
    ref = reference(x, gamma, beta, w, b)

    fn = jax.jit(sublayer_connection, donate_argnums=0)
    out = jax.block_until_ready(fn(x, gamma, beta, w, b))

    assert out.shape == (B, S, D)
    assert jnp.allclose(out, ref, atol=1e-4, rtol=1e-4), "mismatch vs reference"

    print("KERNEL_OK")
</pallas_src>

<mosaic_0001>
module attributes {stable_mosaic.version = 11 : i64} {
  func.func @kernel(%arg0: i32, %arg1: i32, %arg2: memref<16x32xf32, #tpu.memory_space<vmem>>, %arg3: memref<1x32xf32, #tpu.memory_space<vmem>>, %arg4: memref<1x32xf32, #tpu.memory_space<vmem>>, %arg5: memref<32x32xf32, #tpu.memory_space<vmem>>, %arg6: memref<1x32xf32, #tpu.memory_space<vmem>>, %arg7: memref<16x32xf32, #tpu.memory_space<vmem>>) attributes {dimension_semantics = [#tpu.dimension_semantics<parallel>, #tpu.dimension_semantics<parallel>], iteration_bounds = array<i64: 1, 1>, scalar_prefetch = 0 : i64, scratch_operands = 0 : i64, tpu.core_type = #tpu.core_type<tc>, window_params = [{transform_indices = @transform_0, window_bounds = array<i64: 16, 32>}, {pipeline_mode = #tpu.pipeline_mode<synchronous>, transform_indices = @transform_1, window_bounds = array<i64: 1, 32>}, {pipeline_mode = #tpu.pipeline_mode<synchronous>, transform_indices = @transform_2, window_bounds = array<i64: 1, 32>}, {transform_indices = @transform_3, window_bounds = array<i64: 32, 32>}, {transform_indices = @transform_4, window_bounds = array<i64: 1, 32>}, {transform_indices = @transform_5, window_bounds = array<i64: 16, 32>}]} {
    %c0 = arith.constant 0 : index
    %c0_0 = arith.constant 0 : index
    %0 = vector.load %arg2[%c0, %c0_0] : memref<16x32xf32, #tpu.memory_space<vmem>>, vector<16x32xf32>
    %c0_1 = arith.constant 0 : index
    %c0_2 = arith.constant 0 : index
    %1 = vector.load %arg3[%c0_1, %c0_2] : memref<1x32xf32, #tpu.memory_space<vmem>>, vector<1x32xf32>
    %c0_3 = arith.constant 0 : index
    %c0_4 = arith.constant 0 : index
    %2 = vector.load %arg4[%c0_3, %c0_4] : memref<1x32xf32, #tpu.memory_space<vmem>>, vector<1x32xf32>
    %c0_5 = arith.constant 0 : index
    %c0_6 = arith.constant 0 : index
    %3 = vector.load %arg6[%c0_5, %c0_6] : memref<1x32xf32, #tpu.memory_space<vmem>>, vector<1x32xf32>
    %cst = arith.constant dense<0.000000e+00> : vector<16xf32>
    %4 = vector.multi_reduction <add>, %0, %cst [1] : vector<16x32xf32> to vector<16xf32>
    %5 = vector.shape_cast %4 : vector<16xf32> to vector<16x1xf32>
    %cst_7 = arith.constant 3.125000e-02 : f32
    %6 = vector.broadcast %cst_7 : f32 to vector<16x1xf32>
    %7 = arith.mulf %5, %6 : vector<16x1xf32>
    %8 = vector.broadcast %7 : vector<16x1xf32> to vector<16x32xf32>
    %9 = arith.subf %0, %8 : vector<16x32xf32>
    %10 = arith.mulf %9, %9 : vector<16x32xf32>
    %cst_8 = arith.constant dense<0.000000e+00> : vector<16xf32>
    %11 = vector.multi_reduction <add>, %10, %cst_8 [1] : vector<16x32xf32> to vector<16xf32>
    %12 = vector.shape_cast %11 : vector<16xf32> to vector<16x1xf32>
    %cst_9 = arith.constant 0.0322580636 : f32
    %13 = vector.broadcast %cst_9 : f32 to vector<16x1xf32>
    %14 = arith.mulf %12, %13 : vector<16x1xf32>
    %15 = math.sqrt %14 : vector<16x1xf32>
    %cst_10 = arith.constant 9.99999997E-7 : f32
    %16 = vector.broadcast %cst_10 : f32 to vector<16x1xf32>
    %17 = arith.addf %15, %16 : vector<16x1xf32>
    %18 = tpu.reciprocal %17 : vector<16x1xf32> -> vector<16x1xf32>
    %19 = vector.broadcast %18 : vector<16x1xf32> to vector<16x32xf32>
    %20 = arith.mulf %9, %19 : vector<16x32xf32>
    %21 = vector.broadcast %1 : vector<1x32xf32> to vector<16x32xf32>
    %22 = arith.mulf %20, %21 : vector<16x32xf32>
    %23 = vector.broadcast %2 : vector<1x32xf32> to vector<16x32xf32>
    %24 = arith.addf %22, %23 : vector<16x32xf32>
    %c0_11 = arith.constant 0 : index
    %c0_12 = arith.constant 0 : index
    %25 = vector.load %arg5[%c0_11, %c0_12] : memref<32x32xf32, #tpu.memory_space<vmem>>, vector<32x32xf32>
    %cst_13 = arith.constant dense<0.000000e+00> : vector<16x32xf32>
    %26 = tpu.matmul %24, %25, %cst_13 {dimension_numbers = #tpu.dot_dimension_numbers<[1], [0], [0], [1], [0, 0, 1, 1], [], []>, precision = #tpu.contract_precision<fp32>} : vector<16x32xf32>, vector<32x32xf32>, vector<16x32xf32> -> vector<16x32xf32>
    %27 = vector.broadcast %3 : vector<1x32xf32> to vector<16x32xf32>
    %28 = arith.addf %26, %27 : vector<16x32xf32>
    %29 = arith.addf %0, %28 : vector<16x32xf32>
    %c0_14 = arith.constant 0 : index
    %c0_15 = arith.constant 0 : index
    %30 = vector.load %arg7[%c0_14, %c0_15] : memref<16x32xf32, #tpu.memory_space<vmem>>, vector<16x32xf32>
    tpu.vector_store %arg7[%c0_14, %c0_15], %29 {strides = array<i32>} : memref<16x32xf32, #tpu.memory_space<vmem>>, vector<16x32xf32>,
    return
  }
  func.func @transform_0(%arg0: i32, %arg1: i32) -> (i32, i32) {
    %c0_i32 = arith.constant 0 : i32
    %c0_i32_0 = arith.constant 0 : i32
    return %arg0, %c0_i32 : i32, i32
  }
  func.func @transform_1(%arg0: i32, %arg1: i32) -> (i32, i32) {
    %c0_i32 = arith.constant 0 : i32
    %c0_i32_0 = arith.constant 0 : i32
    %c0_i32_1 = arith.constant 0 : i32
    return %c0_i32, %c0_i32_0 : i32, i32
  }
  func.func @transform_2(%arg0: i32, %arg1: i32) -> (i32, i32) {
    %c0_i32 = arith.constant 0 : i32
    %c0_i32_0 = arith.constant 0 : i32
    %c0_i32_1 = arith.constant 0 : i32
    return %c0_i32, %c0_i32_0 : i32, i32
  }
  func.func @transform_3(%arg0: i32, %arg1: i32) -> (i32, i32) {
    %c0_i32 = arith.constant 0 : i32
    %c0_i32_0 = arith.constant 0 : i32
    return %c0_i32, %arg1 : i32, i32
  }
  func.func @transform_4(%arg0: i32, %arg1: i32) -> (i32, i32) {
    %c0_i32 = arith.constant 0 : i32
    %c0_i32_0 = arith.constant 0 : i32
    return %c0_i32, %arg1 : i32, i32
  }
  func.func @transform_5(%arg0: i32, %arg1: i32) -> (i32, i32) {
    %c0_i32 = arith.constant 0 : i32
    return %arg0, %arg1 : i32, i32
  }
}

</mosaic_0001>

<llo_original>
// kernel: sublayer_connection.1
$region0: #{sublayer_connection.1}
  #allocation0 [shape = 'u32[]', space=smem, size = 0x4, offset = 0x4, fixed_abs, tag = 'smem constant byte address 0x4 - core index']
  #allocation1 [shape = 'u32[144,128]{1,0:T(1,128)}', space=vmem, size = 0x12000, scoped, tag = 'internal scratch']
  %s0 = inlined_call_operand.hbm [shape: f32[16,32], index: 0, kind: input, shape index: {}, may-alias: {0,5}]
  %s1 = inlined_call_operand.vmem [shape: f32[1,32], index: 1, kind: input, shape index: {}]
  %s2 = inlined_call_operand.vmem [shape: f32[1,32], index: 2, kind: input, shape index: {}]
  %s3 = inlined_call_operand.hbm [shape: f32[32,32], index: 3, kind: input, shape index: {}]
  %s4 = inlined_call_operand.vmem [shape: f32[1,32], index: 4, kind: input, shape index: {}]
  %s5 = inlined_call_operand.hbm [shape: f32[16,32], index: 5, kind: output, shape index: {}, may-alias: {0,5}]
  %s6 = sld [smem:[#allocation0]]
  $region38: #{sublayer_connection.1} parent=0
    _
  %s8 = ssub.s32 1, %s6
  %s9 = scalar_select 0, %s8, %s6
  $region1: #{sublayer_connection.1} parent=0
    #allocation2 [shape = 'u8[8192]{0}', space=vmem, size = 0x2000, scoped, tag = 'input window, operand 0, single buffered']
    #allocation3 [shape = 's32[1]{0}', space=sflag, size = 0x4, scoped, tag = 'scoped memory for sublayer_connection.1']
    #allocation4 [shape = 's32[1]{0}', space=sflag, size = 0x4, scoped, tag = 'scoped memory for sublayer_connection.1']
    #allocation5 [shape = 'u8[16384]{0}', space=vmem, size = 0x4000, scoped, tag = 'input window, operand 3, single buffered']
    #allocation6 [shape = 's32[1]{0}', space=sflag, size = 0x4, scoped, tag = 'scoped memory for sublayer_connection.1']
    #allocation7 [shape = 'u8[8192]{0}', space=vmem, size = 0x2000, scoped, tag = 'output window, operand 0, single buffered']
    %10 = vsyncpa [#allocation3], 0
    %11 = vsyncpa [#allocation6], 0
    %12 = vsyncpa [#allocation4], 0
    // Predicated region
    $region2: #{sublayer_connection.1} parent=1 // pred_check
      _
    $region3: #{sublayer_connection.1} parent=1 // pred_check_branch
      %14 = sbr.rel (0) target = $region5
    $region4: #{sublayer_connection.1} parent=1 // pred_region
      %s16 = ssub.s32 256, 256
      %17 = vsyncadd [#allocation3], %s16
      %s18 = sshll.u32 [#allocation2], 4
      %s19 = int_to_ptr.vmem [resolvable:$true] %s18
      %24 = dma.hbm_to_vmem [thread:$0]  %s0, 256, %s19, [#allocation3], 128, 128, 8
    $region5: #{sublayer_connection.1} parent=1 // pred_fallthru
      _
    // Predicated region
    $region6: #{sublayer_connection.1} parent=1 // pred_check
      _
    $region7: #{sublayer_connection.1} parent=1 // pred_check_branch
      %26 = sbr.rel (0) target = $region9
    $region8: #{sublayer_connection.1} parent=1 // pred_region
      _
    $region9: #{sublayer_connection.1} parent=1 // pred_fallthru
      _
    // Predicated region
    $region10: #{sublayer_connection.1} parent=1 // pred_check
      _
    $region11: #{sublayer_connection.1} parent=1 // pred_check_branch
      %28 = sbr.rel (0) target = $region13
    $region12: #{sublayer_connection.1} parent=1 // pred_region
      _
    $region13: #{sublayer_connection.1} parent=1 // pred_fallthru
      _
    // Predicated region
    $region14: #{sublayer_connection.1} parent=1 // pred_check
      _
    $region15: #{sublayer_connection.1} parent=1 // pred_check_branch
      %30 = sbr.rel (0) target = $region17
    $region16: #{sublayer_connection.1} parent=1 // pred_region
      %s32 = ssub.s32 512, 512
      %33 = vsyncadd [#allocation6], %s32
      %s34 = sshll.u32 [#allocation5], 4
      %s35 = int_to_ptr.vmem [resolvable:$true] %s34
      %40 = dma.hbm_to_vmem [thread:$0]  %s3, 512, %s35, [#allocation6], 128, 128, 8
    $region17: #{sublayer_connection.1} parent=1 // pred_fallthru
      _
    // Predicated region
    $region18: #{sublayer_connection.1} parent=1 // pred_check
      _
    $region19: #{sublayer_connection.1} parent=1 // pred_check_branch
      %42 = sbr.rel (0) target = $region21
    $region20: #{sublayer_connection.1} parent=1 // pred_region
      _
    $region21: #{sublayer_connection.1} parent=1 // pred_fallthru
      _
    // Predicated region
    $region22: #{sublayer_connection.1} parent=1 // pred_check
      _
    $region23: #{sublayer_connection.1} parent=1 // pred_check_branch
      %44 = sbr.rel (0) target = $region25
    $region24: #{sublayer_connection.1} parent=1 // pred_region
      %45 = dma.done [#allocation3], 256
    $region25: #{sublayer_connection.1} parent=1 // pred_fallthru
      _
    // Predicated region
    $region26: #{sublayer_connection.1} parent=1 // pred_check
      _
    $region27: #{sublayer_connection.1} parent=1 // pred_check_branch
      %47 = sbr.rel (0) target = $region29
    $region28: #{sublayer_connection.1} parent=1 // pred_region
      %48 = dma.done [#allocation6], 512
    $region29: #{sublayer_connection.1} parent=1 // pred_fallthru
      _
    %v49 = vld [vmem:[#allocation2] sm:$0xff]
    %v50 = vld [vmem:[#allocation2 + $0x8] sm:$0xff]
    %v51 = vld [vmem:[%s1] sm:$0x1]
    %v52 = vld [vmem:[%s2] sm:$0x1]
    %v53 = vld [vmem:[%s4] sm:$0x1]
    %vm54 = vcmask 261120
    %v55 = vsel %vm54, %v49, 0.0
    %56 = vadd.xlane.f32.xlu0 %v55
    %v57 = vpop.xlane.xlu0 %56
    %v58 = vsel %vm54, %v50, 0.0
    %59 = vadd.xlane.f32.xlu0 %v58
    %v60 = vpop.xlane.xlu0 %59
    %v61 = vmul.f32 %v57, 0.03125
    %v62 = vmul.f32 %v60, 0.03125
    %v63 = vsub.f32 %v49, %v61
    %v64 = vsub.f32 %v50, %v62
    %v65 = vmul.f32 %v63, %v63
    %v66 = vmul.f32 %v64, %v64
    %v67 = vsel %vm54, %v65, 0.0
    %68 = vadd.xlane.f32.xlu0 %v67
    %v69 = vpop.xlane.xlu0 %68
    %v70 = vsel %vm54, %v66, 0.0
    %71 = vadd.xlane.f32.xlu0 %v70
    %v72 = vpop.xlane.xlu0 %71
    %v73 = vmul.f32 %v69, 0.032258064
    %v74 = vmul.f32 %v72, 0.032258064
    %v75 = vrsqrt.pop %v73
    %v76 = vmul.f32 %v73, %v75
    %vm77 = vcmp.eq.f32.partialorder %v73, inf
    %v78 = vsel %vm77, %v73, %v76
    %vm79 = vcmp.eq.f32.partialorder %v73, 0.0
    %v80 = vand.u32 %v73, 2147483648
    %v81 = vsel %vm79, %v80, %v78
    %v82 = vrsqrt.pop %v74
    %v83 = vmul.f32 %v74, %v82
    %vm84 = vcmp.eq.f32.partialorder %v74, inf
    %v85 = vsel %vm84, %v74, %v83
    %vm86 = vcmp.eq.f32.partialorder %v74, 0.0
    %v87 = vand.u32 %v74, 2147483648
    %v88 = vsel %vm86, %v87, %v85
    %v89 = vadd.f32 %v81, 1e-06
    %v90 = vadd.f32 %v88, 1e-06
    %v91 = vrcp.pop %v89
    %v92 = vrcp.pop %v90
    %v93 = vmul.f32 %v63, %v91
    %v94 = vmul.f32 %v64, %v92
    %v96 = vlaneseq
    %v97 = vshrl.u32 %v96, 7
    %v98 = vsub.s32 0, %v97
    %v99 = vrot.slane %v51, %v98
    %v101 = vmul.f32 %v93, %v99
    %v102 = vmul.f32 %v94, %v99
    %v104 = vlaneseq
    %v105 = vshrl.u32 %v104, 7
    %v106 = vsub.s32 0, %v105
    %v107 = vrot.slane %v52, %v106
    %v109 = vadd.f32 %v101, %v107
    %v110 = vadd.f32 %v102, %v107
    %v111 = vld [vmem:[#allocation5] sm:$0xff]
    %v112 = vld [vmem:[#allocation5 + $0x8] sm:$0xff]
    %v113 = vld [vmem:[#allocation5 + $0x10] sm:$0xff]
    %v114 = vld [vmem:[#allocation5 + $0x18] sm:$0xff]
    %v116 = vlaneseq
    %v117 = vshrl.u32 %v116, 7
    %v118 = vsub.s32 0, %v117
    %v119 = vrot.slane %v53, %v118
    %v122 = vsel %vm54, %v109, 0
    %v125 = vsel %vm54, %v110, 0
    %127 = vmatprep.subr.mxu0 0.0
    %128 = vmatpush1.msra.mxu0 0.0
    %129 = vmatprep.subr.mxu0 0.0
    %130 = vmatpush1.msra.mxu0 0.0
    %131 = vmatprep.subr.mxu0 0.0
    %132 = vmatpush1.msra.mxu0 0.0
    %133 = vmatprep.subr.mxu0 0.0
    %134 = vmatpush1.msra.mxu0 0.0
    %135 = vmatprep.subr.mxu0 0.0
    %136 = vmatpush1.msra.mxu0 0.0
    %137 = vmatprep.subr.mxu0 0.0
    %138 = vmatpush1.msra.mxu0 0.0
    %139 = vmatprep.subr.mxu0 0.0
    %140 = vmatpush1.msra.mxu0 0.0
    %141 = vmatprep.subr.mxu0 0.0
    %142 = vmatpush1.msra.mxu0 0.0
    %143 = vmatprep.subr.mxu0 0.0
    %144 = vmatpush1.msra.mxu0 0.0
    %145 = vmatprep.subr.mxu0 0.0
    %146 = vmatpush1.msra.mxu0 0.0
    %147 = vmatprep.subr.mxu0 0.0
    %148 = vmatpush1.msra.mxu0 0.0
    %149 = vmatprep.subr.mxu0 0.0
    %150 = vmatpush1.msra.mxu0 0.0
    %151 = vmatprep.subr.mxu0 0.0
    %v152 = vand.u32 %v114, 4294901760
    %153 = vmatpush1.msra.mxu0 %v152
    %154 = vmatprep.subr.mxu0 0.0
    %v155 = vand.u32 %v113, 4294901760
    %156 = vmatpush1.msra.mxu0 %v155
    %157 = vmatprep.subr.mxu0 0.0
    %v158 = vand.u32 %v112, 4294901760
    %159 = vmatpush1.msra.mxu0 %v158
    %160 = vmatprep.subr.mxu0 0.0
    %v161 = vand.u32 %v111, 4294901760
    %162 = vmatpush1.msra.mxu0 %v161
    %163 = vmatprep.subr.mxu0 0.0
    %164 = vmatpush2.msra.mxu0 0.0
    %165 = vmatprep.subr.mxu0 0.0
    %166 = vmatpush2.msra.mxu0 0.0
    %167 = vmatprep.subr.mxu0 0.0
    %168 = vmatpush2.msra.mxu0 0.0
    %169 = vmatprep.subr.mxu0 0.0
    %170 = vmatpush2.msra.mxu0 0.0
    %171 = vmatprep.subr.mxu0 0.0
    %172 = vmatpush2.msra.mxu0 0.0
    %173 = vmatprep.subr.mxu0 0.0
    %174 = vmatpush2.msra.mxu0 0.0
    %175 = vmatprep.subr.mxu0 0.0
    %176 = vmatpush2.msra.mxu0 0.0
    %177 = vmatprep.subr.mxu0 0.0
    %178 = vmatpush2.msra.mxu0 0.0
    %179 = vmatprep.subr.mxu0 0.0
    %180 = vmatpush2.msra.mxu0 0.0
    %181 = vmatprep.subr.mxu0 0.0
    %182 = vmatpush2.msra.mxu0 0.0
    %183 = vmatprep.subr.mxu0 0.0
    %184 = vmatpush2.msra.mxu0 0.0
    %185 = vmatprep.subr.mxu0 0.0
    %186 = vmatpush2.msra.mxu0 0.0
    %187 = vmatprep.subr.mxu0 0.0
    %188 = vmatpush2.msra.mxu0 0.0
    %189 = vmatprep.subr.mxu0 0.0
    %190 = vmatpush2.msra.mxu0 0.0
    %191 = vmatprep.subr.mxu0 0.0
    %192 = vmatpush2.msra.mxu0 0.0
    %193 = vmatprep.subr.mxu0 0.0
    %194 = vmatpush2.msra.mxu0 0.0
    %195 = vmatprep.mubr.f32.mxu0 0.0
    %v196 = vand.u32 %v122, 4294901760
    %v197 = vsub.f32 %v122, %v196
    %v198 = vand.u32 %v197, 4294901760
    %v199 = vsub.f32 %v197, %v198
    %v200 = vand.u32 %v199, 4294901760
    %201 = vmatmul.mubr.f32.gmra.mxu0 %v200
    %v202 = vpop.f32.mrf.mxu0
    %v203 = vadd.f32 %v119, %v202
    %v204 = vpop.f32.mrf.mxu0
    %205 = vmatprep.mubr.f32.mxu0 0.0
    %v206 = vand.u32 %v125, 4294901760
    %v207 = vsub.f32 %v125, %v206
    %v208 = vand.u32 %v207, 4294901760
    %v209 = vsub.f32 %v207, %v208
    %v210 = vand.u32 %v209, 4294901760
    %211 = vmatmul.mubr.f32.gmra.mxu0 %v210
    %v212 = vpop.f32.mrf.mxu0
    %v213 = vadd.f32 %v119, %v212
    %v214 = vpop.f32.mrf.mxu0
    %215 = vdwg.mxu0
    %216 = vmatprep.subr.mxu0 0.0
    %217 = vmatpush1.msra.mxu0 0.0
    %218 = vmatprep.subr.mxu0 0.0
    %219 = vmatpush1.msra.mxu0 0.0
    %220 = vmatprep.subr.mxu0 0.0
    %221 = vmatpush1.msra.mxu0 0.0
    %222 = vmatprep.subr.mxu0 0.0
    %223 = vmatpush1.msra.mxu0 0.0
    %224 = vmatprep.subr.mxu0 0.0
    %225 = vmatpush1.msra.mxu0 0.0
    %226 = vmatprep.subr.mxu0 0.0
    %227 = vmatpush1.msra.mxu0 0.0
    %228 = vmatprep.subr.mxu0 0.0
    %229 = vmatpush1.msra.mxu0 0.0
    %230 = vmatprep.subr.mxu0 0.0
    %231 = vmatpush1.msra.mxu0 0.0
    %232 = vmatprep.subr.mxu0 0.0
    %233 = vmatpush1.msra.mxu0 0.0
    %234 = vmatprep.subr.mxu0 0.0
    %235 = vmatpush1.msra.mxu0 0.0
    %236 = vmatprep.subr.mxu0 0.0
    %237 = vmatpush1.msra.mxu0 0.0
    %238 = vmatprep.subr.mxu0 0.0
    %239 = vmatpush1.msra.mxu0 0.0
    %240 = vmatprep.subr.mxu0 0.0
    %v241 = vand.u32 %v114, 4294901760
    %v242 = vsub.f32 %v114, %v241
    %v243 = vand.u32 %v242, 4294901760
    %v244 = vsub.f32 %v242, %v243
    %v245 = vand.u32 %v244, 4294901760
    %246 = vmatpush1.msra.mxu0 %v245
    %247 = vmatprep.subr.mxu0 0.0
    %v248 = vand.u32 %v113, 4294901760
    %v249 = vsub.f32 %v113, %v248
    %v250 = vand.u32 %v249, 4294901760
    %v251 = vsub.f32 %v249, %v250
    %v252 = vand.u32 %v251, 4294901760
    %253 = vmatpush1.msra.mxu0 %v252
    %254 = vmatprep.subr.mxu0 0.0
    %v255 = vand.u32 %v112, 4294901760
    %v256 = vsub.f32 %v112, %v255
    %v257 = vand.u32 %v256, 4294901760
    %v258 = vsub.f32 %v256, %v257
    %v259 = vand.u32 %v258, 4294901760
    %260 = vmatpush1.msra.mxu0 %v259
    %261 = vmatprep.subr.mxu0 0.0
    %v262 = vand.u32 %v111, 4294901760
    %v263 = vsub.f32 %v111, %v262
    %v264 = vand.u32 %v263, 4294901760
    %v265 = vsub.f32 %v263, %v264
    %v266 = vand.u32 %v265, 4294901760
    %267 = vmatpush1.msra.mxu0 %v266
    %268 = vmatprep.subr.mxu0 0.0
    %269 = vmatpush2.msra.mxu0 0.0
    %270 = vmatprep.subr.mxu0 0.0
    %271 = vmatpush2.msra.mxu0 0.0
    %272 = vmatprep.subr.mxu0 0.0
    %273 = vmatpush2.msra.mxu0 0.0
    %274 = vmatprep.subr.mxu0 0.0
    %275 = vmatpush2.msra.mxu0 0.0
    %276 = vmatprep.subr.mxu0 0.0
    %277 = vmatpush2.msra.mxu0 0.0
    %278 = vmatprep.subr.mxu0 0.0
    %279 = vmatpush2.msra.mxu0 0.0
    %280 = vmatprep.subr.mxu0 0.0
    %281 = vmatpush2.msra.mxu0 0.0
    %282 = vmatprep.subr.mxu0 0.0
    %283 = vmatpush2.msra.mxu0 0.0
    %284 = vmatprep.subr.mxu0 0.0
    %285 = vmatpush2.msra.mxu0 0.0
    %286 = vmatprep.subr.mxu0 0.0
    %287 = vmatpush2.msra.mxu0 0.0
    %288 = vmatprep.subr.mxu0 0.0
    %289 = vmatpush2.msra.mxu0 0.0
    %290 = vmatprep.subr.mxu0 0.0
    %291 = vmatpush2.msra.mxu0 0.0
    %292 = vmatprep.subr.mxu0 0.0
    %293 = vmatpush2.msra.mxu0 0.0
    %294 = vmatprep.subr.mxu0 0.0
    %295 = vmatpush2.msra.mxu0 0.0
    %296 = vmatprep.subr.mxu0 0.0
    %297 = vmatpush2.msra.mxu0 0.0
    %298 = vmatprep.subr.mxu0 0.0
    %299 = vmatpush2.msra.mxu0 0.0
    %300 = vmatprep.mubr.f32.mxu0 0.0
    %v301 = vand.u32 %v122, 4294901760
    %302 = vmatmul.mubr.f32.gmra.mxu0 %v301
    %v303 = vpop.f32.mrf.mxu0
    %v304 = vadd.f32 %v203, %v303
    %v305 = vpop.f32.mrf.mxu0
    %306 = vmatprep.mubr.f32.mxu0 0.0
    %v307 = vand.u32 %v125, 4294901760
    %308 = vmatmul.mubr.f32.gmra.mxu0 %v307
    %v309 = vpop.f32.mrf.mxu0
    %v310 = vadd.f32 %v213, %v309
    %v311 = vpop.f32.mrf.mxu0
    %312 = vdwg.mxu0
    %313 = vmatprep.subr.mxu0 0.0
    %314 = vmatpush1.msra.mxu0 0.0
    %315 = vmatprep.subr.mxu0 0.0
    %316 = vmatpush1.msra.mxu0 0.0
    %317 = vmatprep.subr.mxu0 0.0
    %318 = vmatpush1.msra.mxu0 0.0
    %319 = vmatprep.subr.mxu0 0.0
    %320 = vmatpush1.msra.mxu0 0.0
    %321 = vmatprep.subr.mxu0 0.0
    %322 = vmatpush1.msra.mxu0 0.0
    %323 = vmatprep.subr.mxu0 0.0
    %324 = vmatpush1.msra.mxu0 0.0
    %325 = vmatprep.subr.mxu0 0.0
    %326 = vmatpush1.msra.mxu0 0.0
    %327 = vmatprep.subr.mxu0 0.0
    %328 = vmatpush1.msra.mxu0 0.0
    %329 = vmatprep.subr.mxu0 0.0
    %330 = vmatpush1.msra.mxu0 0.0
    %331 = vmatprep.subr.mxu0 0.0
    %332 = vmatpush1.msra.mxu0 0.0
    %333 = vmatprep.subr.mxu0 0.0
    %334 = vmatpush1.msra.mxu0 0.0
    %335 = vmatprep.subr.mxu0 0.0
    %336 = vmatpush1.msra.mxu0 0.0
    %337 = vmatprep.subr.mxu0 0.0
    %v338 = vand.u32 %v114, 4294901760
    %v339 = vsub.f32 %v114, %v338
    %340 = vmatpush1.msra.mxu0 %v339
    %341 = vmatprep.subr.mxu0 0.0
    %v342 = vand.u32 %v113, 4294901760
    %v343 = vsub.f32 %v113, %v342
    %344 = vmatpush1.msra.mxu0 %v343
    %345 = vmatprep.subr.mxu0 0.0
    %v346 = vand.u32 %v112, 4294901760
    %v347 = vsub.f32 %v112, %v346
    %348 = vmatpush1.msra.mxu0 %v347
    %349 = vmatprep.subr.mxu0 0.0
    %v350 = vand.u32 %v111, 4294901760
    %v351 = vsub.f32 %v111, %v350
    %352 = vmatpush1.msra.mxu0 %v351
    %353 = vmatprep.subr.mxu0 0.0
    %354 = vmatpush2.msra.mxu0 0.0
    %355 = vmatprep.subr.mxu0 0.0
    %356 = vmatpush2.msra.mxu0 0.0
    %357 = vmatprep.subr.mxu0 0.0
    %358 = vmatpush2.msra.mxu0 0.0
    %359 = vmatprep.subr.mxu0 0.0
    %360 = vmatpush2.msra.mxu0 0.0
    %361 = vmatprep.subr.mxu0 0.0
    %362 = vmatpush2.msra.mxu0 0.0
    %363 = vmatprep.subr.mxu0 0.0
    %364 = vmatpush2.msra.mxu0 0.0
    %365 = vmatprep.subr.mxu0 0.0
    %366 = vmatpush2.msra.mxu0 0.0
    %367 = vmatprep.subr.mxu0 0.0
    %368 = vmatpush2.msra.mxu0 0.0
    %369 = vmatprep.subr.mxu0 0.0
    %370 = vmatpush2.msra.mxu0 0.0
    %371 = vmatprep.subr.mxu0 0.0
    %372 = vmatpush2.msra.mxu0 0.0
    %373 = vmatprep.subr.mxu0 0.0
    %374 = vmatpush2.msra.mxu0 0.0
    %375 = vmatprep.subr.mxu0 0.0
    %376 = vmatpush2.msra.mxu0 0.0
    %377 = vmatprep.subr.mxu0 0.0
    %378 = vmatpush2.msra.mxu0 0.0
    %379 = vmatprep.subr.mxu0 0.0
    %380 = vmatpush2.msra.mxu0 0.0
    %381 = vmatprep.subr.mxu0 0.0
    %382 = vmatpush2.msra.mxu0 0.0
    %383 = vmatprep.subr.mxu0 0.0
    %384 = vmatpush2.msra.mxu0 0.0
    %385 = vmatprep.mubr.f32.mxu0 0.0
    %v386 = vand.u32 %v122, 4294901760
    %v387 = vsub.f32 %v122, %v386
    %388 = vmatmul.mubr.f32.gmra.mxu0 %v387
    %v389 = vpop.f32.mrf.mxu0
    %v390 = vadd.f32 %v304, %v389
    %v391 = vpop.f32.mrf.mxu0
    %392 = vmatprep.mubr.f32.mxu0 0.0
    %v393 = vand.u32 %v125, 4294901760
    %v394 = vsub.f32 %v125, %v393
    %395 = vmatmul.mubr.f32.gmra.mxu0 %v394
    %v396 = vpop.f32.mrf.mxu0
    %v397 = vadd.f32 %v310, %v396
    %v398 = vpop.f32.mrf.mxu0
    %399 = vdwg.mxu0
    %400 = vmatprep.subr.mxu0 0.0
    %401 = vmatpush1.msra.mxu0 0.0
    %402 = vmatprep.subr.mxu0 0.0
    %403 = vmatpush1.msra.mxu0 0.0
    %404 = vmatprep.subr.mxu0 0.0
    %405 = vmatpush1.msra.mxu0 0.0
    %406 = vmatprep.subr.mxu0 0.0
    %407 = vmatpush1.msra.mxu0 0.0
    %408 = vmatprep.subr.mxu0 0.0
    %409 = vmatpush1.msra.mxu0 0.0
    %410 = vmatprep.subr.mxu0 0.0
    %411 = vmatpush1.msra.mxu0 0.0
    %412 = vmatprep.subr.mxu0 0.0
    %413 = vmatpush1.msra.mxu0 0.0
    %414 = vmatprep.subr.mxu0 0.0
    %415 = vmatpush1.msra.mxu0 0.0
    %416 = vmatprep.subr.mxu0 0.0
    %417 = vmatpush1.msra.mxu0 0.0
    %418 = vmatprep.subr.mxu0 0.0
    %419 = vmatpush1.msra.mxu0 0.0
    %420 = vmatprep.subr.mxu0 0.0
    %421 = vmatpush1.msra.mxu0 0.0
    %422 = vmatprep.subr.mxu0 0.0
    %423 = vmatpush1.msra.mxu0 0.0
    %424 = vmatprep.subr.mxu0 0.0
    %v425 = vand.u32 %v114, 4294901760
    %426 = vmatpush1.msra.mxu0 %v425
    %427 = vmatprep.subr.mxu0 0.0
    %v428 = vand.u32 %v113, 4294901760
    %429 = vmatpush1.msra.mxu0 %v428
    %430 = vmatprep.subr.mxu0 0.0
    %v431 = vand.u32 %v112, 4294901760
    %432 = vmatpush1.msra.mxu0 %v431
    %433 = vmatprep.subr.mxu0 0.0
    %v434 = vand.u32 %v111, 4294901760
    %435 = vmatpush1.msra.mxu0 %v434
    %436 = vmatprep.subr.mxu0 0.0
    %437 = vmatpush2.msra.mxu0 0.0
    %438 = vmatprep.subr.mxu0 0.0
    %439 = vmatpush2.msra.mxu0 0.0
    %440 = vmatprep.subr.mxu0 0.0
    %441 = vmatpush2.msra.mxu0 0.0
    %442 = vmatprep.subr.mxu0 0.0
    %443 = vmatpush2.msra.mxu0 0.0
    %444 = vmatprep.subr.mxu0 0.0
    %445 = vmatpush2.msra.mxu0 0.0
    %446 = vmatprep.subr.mxu0 0.0
    %447 = vmatpush2.msra.mxu0 0.0
    %448 = vmatprep.subr.mxu0 0.0
    %449 = vmatpush2.msra.mxu0 0.0
    %450 = vmatprep.subr.mxu0 0.0
    %451 = vmatpush2.msra.mxu0 0.0
    %452 = vmatprep.subr.mxu0 0.0
    %453 = vmatpush2.msra.mxu0 0.0
    %454 = vmatprep.subr.mxu0 0.0
    %455 = vmatpush2.msra.mxu0 0.0
    %456 = vmatprep.subr.mxu0 0.0
    %457 = vmatpush2.msra.mxu0 0.0
    %458 = vmatprep.subr.mxu0 0.0
    %459 = vmatpush2.msra.mxu0 0.0
    %460 = vmatprep.subr.mxu0 0.0
    %461 = vmatpush2.msra.mxu0 0.0
    %462 = vmatprep.subr.mxu0 0.0
    %463 = vmatpush2.msra.mxu0 0.0
    %464 = vmatprep.subr.mxu0 0.0
    %465 = vmatpush2.msra.mxu0 0.0
    %466 = vmatprep.subr.mxu0 0.0
    %467 = vmatpush2.msra.mxu0 0.0
    %468 = vmatprep.mubr.f32.mxu0 0.0
    %v469 = vand.u32 %v122, 4294901760
    %v470 = vsub.f32 %v122, %v469
    %v471 = vand.u32 %v470, 4294901760
    %472 = vmatmul.mubr.f32.gmra.mxu0 %v471
    %v473 = vpop.f32.mrf.mxu0
    %v474 = vadd.f32 %v390, %v473
    %v475 = vpop.f32.mrf.mxu0
    %476 = vmatprep.mubr.f32.mxu0 0.0
    %v477 = vand.u32 %v125, 4294901760
    %v478 = vsub.f32 %v125, %v477
    %v479 = vand.u32 %v478, 4294901760
    %480 = vmatmul.mubr.f32.gmra.mxu0 %v479
    %v481 = vpop.f32.mrf.mxu0
    %v482 = vadd.f32 %v397, %v481
    %v483 = vpop.f32.mrf.mxu0
    %484 = vdwg.mxu0
    %485 = vmatprep.subr.mxu0 0.0
    %486 = vmatpush1.msra.mxu0 0.0
    %487 = vmatprep.subr.mxu0 0.0
    %488 = vmatpush1.msra.mxu0 0.0
    %489 = vmatprep.subr.mxu0 0.0
    %490 = vmatpush1.msra.mxu0 0.0
    %491 = vmatprep.subr.mxu0 0.0
    %492 = vmatpush1.msra.mxu0 0.0
    %493 = vmatprep.subr.mxu0 0.0
    %494 = vmatpush1.msra.mxu0 0.0
    %495 = vmatprep.subr.mxu0 0.0
    %496 = vmatpush1.msra.mxu0 0.0
    %497 = vmatprep.subr.mxu0 0.0
    %498 = vmatpush1.msra.mxu0 0.0
    %499 = vmatprep.subr.mxu0 0.0
    %500 = vmatpush1.msra.mxu0 0.0
    %501 = vmatprep.subr.mxu0 0.0
    %502 = vmatpush1.msra.mxu0 0.0
    %503 = vmatprep.subr.mxu0 0.0
    %504 = vmatpush1.msra.mxu0 0.0
    %505 = vmatprep.subr.mxu0 0.0
    %506 = vmatpush1.msra.mxu0 0.0
    %507 = vmatprep.subr.mxu0 0.0
    %508 = vmatpush1.msra.mxu0 0.0
    %509 = vmatprep.subr.mxu0 0.0
    %v510 = vand.u32 %v114, 4294901760
    %v511 = vsub.f32 %v114, %v510
    %v512 = vand.u32 %v511, 4294901760
    %513 = vmatpush1.msra.mxu0 %v512
    %514 = vmatprep.subr.mxu0 0.0
    %v515 = vand.u32 %v113, 4294901760
    %v516 = vsub.f32 %v113, %v515
    %v517 = vand.u32 %v516, 4294901760
    %518 = vmatpush1.msra.mxu0 %v517
    %519 = vmatprep.subr.mxu0 0.0
    %v520 = vand.u32 %v112, 4294901760
    %v521 = vsub.f32 %v112, %v520
    %v522 = vand.u32 %v521, 4294901760
    %523 = vmatpush1.msra.mxu0 %v522
    %524 = vmatprep.subr.mxu0 0.0
    %v525 = vand.u32 %v111, 4294901760
    %v526 = vsub.f32 %v111, %v525
    %v527 = vand.u32 %v526, 4294901760
    %528 = vmatpush1.msra.mxu0 %v527
    %529 = vmatprep.subr.mxu0 0.0
    %530 = vmatpush2.msra.mxu0 0.0
    %531 = vmatprep.subr.mxu0 0.0
    %532 = vmatpush2.msra.mxu0 0.0
    %533 = vmatprep.subr.mxu0 0.0
    %534 = vmatpush2.msra.mxu0 0.0
    %535 = vmatprep.subr.mxu0 0.0
    %536 = vmatpush2.msra.mxu0 0.0
    %537 = vmatprep.subr.mxu0 0.0
    %538 = vmatpush2.msra.mxu0 0.0
    %539 = vmatprep.subr.mxu0 0.0
    %540 = vmatpush2.msra.mxu0 0.0
    %541 = vmatprep.subr.mxu0 0.0
    %542 = vmatpush2.msra.mxu0 0.0
    %543 = vmatprep.subr.mxu0 0.0
    %544 = vmatpush2.msra.mxu0 0.0
    %545 = vmatprep.subr.mxu0 0.0
    %546 = vmatpush2.msra.mxu0 0.0
    %547 = vmatprep.subr.mxu0 0.0
    %548 = vmatpush2.msra.mxu0 0.0
    %549 = vmatprep.subr.mxu0 0.0
    %550 = vmatpush2.msra.mxu0 0.0
    %551 = vmatprep.subr.mxu0 0.0
    %552 = vmatpush2.msra.mxu0 0.0
    %553 = vmatprep.subr.mxu0 0.0
    %554 = vmatpush2.msra.mxu0 0.0
    %555 = vmatprep.subr.mxu0 0.0
    %556 = vmatpush2.msra.mxu0 0.0
    %557 = vmatprep.subr.mxu0 0.0
    %558 = vmatpush2.msra.mxu0 0.0
    %559 = vmatprep.subr.mxu0 0.0
    %560 = vmatpush2.msra.mxu0 0.0
    %561 = vmatprep.mubr.f32.mxu0 0.0
    %v562 = vand.u32 %v122, 4294901760
    %563 = vmatmul.mubr.f32.gmra.mxu0 %v562
    %v564 = vpop.f32.mrf.mxu0
    %v565 = vadd.f32 %v474, %v564
    %v566 = vpop.f32.mrf.mxu0
    %567 = vmatprep.mubr.f32.mxu0 0.0
    %v568 = vand.u32 %v125, 4294901760
    %569 = vmatmul.mubr.f32.gmra.mxu0 %v568
    %v570 = vpop.f32.mrf.mxu0
    %v571 = vadd.f32 %v482, %v570
    %v572 = vpop.f32.mrf.mxu0
    %573 = vdwg.mxu0
    %574 = vmatprep.subr.mxu0 0.0
    %575 = vmatpush1.msra.mxu0 0.0
    %576 = vmatprep.subr.mxu0 0.0
    %577 = vmatpush1.msra.mxu0 0.0
    %578 = vmatprep.subr.mxu0 0.0
    %579 = vmatpush1.msra.mxu0 0.0
    %580 = vmatprep.subr.mxu0 0.0
    %581 = vmatpush1.msra.mxu0 0.0
    %582 = vmatprep.subr.mxu0 0.0
    %583 = vmatpush1.msra.mxu0 0.0
    %584 = vmatprep.subr.mxu0 0.0
    %585 = vmatpush1.msra.mxu0 0.0
    %586 = vmatprep.subr.mxu0 0.0
    %587 = vmatpush1.msra.mxu0 0.0
    %588 = vmatprep.subr.mxu0 0.0
    %589 = vmatpush1.msra.mxu0 0.0
    %590 = vmatprep.subr.mxu0 0.0
    %591 = vmatpush1.msra.mxu0 0.0
    %592 = vmatprep.subr.mxu0 0.0
    %593 = vmatpush1.msra.mxu0 0.0
    %594 = vmatprep.subr.mxu0 0.0
    %595 = vmatpush1.msra.mxu0 0.0
    %596 = vmatprep.subr.mxu0 0.0
    %597 = vmatpush1.msra.mxu0 0.0
    %598 = vmatprep.subr.mxu0 0.0
    %v599 = vand.u32 %v114, 4294901760
    %600 = vmatpush1.msra.mxu0 %v599
    %601 = vmatprep.subr.mxu0 0.0
    %v602 = vand.u32 %v113, 4294901760
    %603 = vmatpush1.msra.mxu0 %v602
    %604 = vmatprep.subr.mxu0 0.0
    %v605 = vand.u32 %v112, 4294901760
    %606 = vmatpush1.msra.mxu0 %v605
    %607 = vmatprep.subr.mxu0 0.0
    %v608 = vand.u32 %v111, 4294901760
    %609 = vmatpush1.msra.mxu0 %v608
    %610 = vmatprep.subr.mxu0 0.0
    %611 = vmatpush2.msra.mxu0 0.0
    %612 = vmatprep.subr.mxu0 0.0
    %613 = vmatpush2.msra.mxu0 0.0
    %614 = vmatprep.subr.mxu0 0.0
    %615 = vmatpush2.msra.mxu0 0.0
    %616 = vmatprep.subr.mxu0 0.0
    %617 = vmatpush2.msra.mxu0 0.0
    %618 = vmatprep.subr.mxu0 0.0
    %619 = vmatpush2.msra.mxu0 0.0
    %620 = vmatprep.subr.mxu0 0.0
    %621 = vmatpush2.msra.mxu0 0.0
    %622 = vmatprep.subr.mxu0 0.0
    %623 = vmatpush2.msra.mxu0 0.0
    %624 = vmatprep.subr.mxu0 0.0
    %625 = vmatpush2.msra.mxu0 0.0
    %626 = vmatprep.subr.mxu0 0.0
    %627 = vmatpush2.msra.mxu0 0.0
    %628 = vmatprep.subr.mxu0 0.0
    %629 = vmatpush2.msra.mxu0 0.0
    %630 = vmatprep.subr.mxu0 0.0
    %631 = vmatpush2.msra.mxu0 0.0
    %632 = vmatprep.subr.mxu0 0.0
    %633 = vmatpush2.msra.mxu0 0.0
    %634 = vmatprep.subr.mxu0 0.0
    %635 = vmatpush2.msra.mxu0 0.0
    %636 = vmatprep.subr.mxu0 0.0
    %637 = vmatpush2.msra.mxu0 0.0
    %638 = vmatprep.subr.mxu0 0.0
    %639 = vmatpush2.msra.mxu0 0.0
    %640 = vmatprep.subr.mxu0 0.0
    %641 = vmatpush2.msra.mxu0 0.0
    %642 = vmatprep.mubr.f32.mxu0 0.0
    %v643 = vand.u32 %v122, 4294901760
    %644 = vmatmul.mubr.f32.gmra.mxu0 %v643
    %v645 = vpop.f32.mrf.mxu0
    %v646 = vadd.f32 %v565, %v645
    %v647 = vpop.f32.mrf.mxu0
    %648 = vmatprep.mubr.f32.mxu0 0.0
    %v649 = vand.u32 %v125, 4294901760
    %650 = vmatmul.mubr.f32.gmra.mxu0 %v649
    %v651 = vpop.f32.mrf.mxu0
    %v652 = vadd.f32 %v571, %v651
    %v653 = vpop.f32.mrf.mxu0
    %654 = vdwg.mxu0
    %v655 = vadd.f32 %v49, %v646
    %v656 = vadd.f32 %v50, %v652
    %657 = vst.msk [vmem:[#allocation7] sm:$0xff] %vm54, %v655
    %658 = vst.msk [vmem:[#allocation7 + $0x8] sm:$0xff] %vm54, %v656
    // Predicated region
    $region30: #{sublayer_connection.1} parent=1 // pred_check
      _
    $region31: #{sublayer_connection.1} parent=1 // pred_check_branch
      %660 = sbr.rel (0) target = $region33
    $region32: #{sublayer_connection.1} parent=1 // pred_region
      %s662 = ssub.s32 256, 256
      %663 = vsyncadd [#allocation4], %s662
      %s664 = sshll.u32 [#allocation7], 4
      %s665 = int_to_ptr.vmem [resolvable:$true] %s664
      %670 = dma.vmem_to_hbm [thread:$0]  %s665, 256, %s5, [#allocation4], 128, 128, 8
    $region33: #{sublayer_connection.1} parent=1 // pred_fallthru
      _
    // Predicated region
    $region34: #{sublayer_connection.1} parent=1 // pred_check
      _
    $region35: #{sublayer_connection.1} parent=1 // pred_check_branch
      %672 = sbr.rel (0) target = $region37
    $region36: #{sublayer_connection.1} parent=1 // pred_region
      %673 = dma.done [#allocation4], 256
    $region37: #{sublayer_connection.1} parent=1 // pred_fallthru
      _
    %674 = vsyncpa [#allocation3], 1
    %675 = vsyncpa [#allocation6], 1
    %676 = vsyncpa [#allocation4], 1

</llo_original>
